<compile_context>
chip_gen: v7x
topology: tpu7x:2x2x1
jax: 0.10.0
libtpu: 0.0.40
codegen_flags: <defaults>
</compile_context>

<pallas_src>
import functools

import jax
import jax.numpy as jnp
from jax.experimental import pallas as pl
from jax.experimental.pallas import tpu as pltpu

EPS = 1e-6  # matches torch.nn.functional.pairwise_distance default eps


def _triplet_loss_kernel(a_ref, p_ref, n_ref, out_ref, *, margin, batch,
                         tile_rows, mask_tail):
    # Upcast once, then stay in f32 (important on v5e: no bf16 VALU path).
    a = a_ref[...].astype(jnp.float32)
    p = p_ref[...].astype(jnp.float32)
    n = n_ref[...].astype(jnp.float32)

    # Per-row L2 distances: lane-axis reduce (XLU) + sqrt (EUP); both sit in
    # slots the DMA/VPU path doesn't use, so they stay hidden (mem-bound).
    dpos = jnp.sqrt(jnp.sum((a - p + EPS) ** 2, axis=-1, keepdims=True))
    dneg = jnp.sqrt(jnp.sum((a - n + EPS) ** 2, axis=-1, keepdims=True))
    hinge = jnp.maximum(dpos - dneg + margin, 0.0)            # (TB, 1)

    if mask_tail:
        # Ragged last tile: rows >= B hold undefined data; zero them out so
        # they don't contribute `margin` (or garbage) to the partial sum.
        row = jax.lax.broadcasted_iota(jnp.int32, hinge.shape, 0)
        valid = (pl.program_id(0) * tile_rows + row) < batch
        hinge = jnp.where(valid, hinge, 0.0)

    # One partial sum per tile, stored lane-dense as a full (8, 128) block
    # (unmasked vst).  The wrapper reads a single element per tile.
    partial = jnp.sum(hinge, axis=0, keepdims=True)           # (1, 1)
    out_ref[0] = jnp.broadcast_to(partial, (8, 128))


def _row_multiple(itemsize):
    # Packed-sublane tile height: 8 rows (f32), 16 (bf16), 32 (int8/fp8).
    return max(8, 32 // int(itemsize))


def _vmem_capacity_bytes():
    try:
        info = pltpu.get_tpu_info()
        for attr in ("vmem_capacity_bytes", "vmem_size_bytes", "vmem_bytes"):
            v = getattr(info, attr, None)
            if v:
                return int(v)
    except Exception:
        pass
    return 64 << 20  # conservative fallback: v7x physical VMEM per TC


def _per_row_vmem_bytes(D, itemsize):
    # 3 inputs x 2 pipeline buffers, plus a generous allowance for the f32
    # upcast / difference temporaries the compiler materializes in VMEM.
    return 3 * 2 * D * itemsize + 6 * D * 4


def _choose_tile_rows(B, D, itemsize, vmem_cap):
    mult = _row_multiple(itemsize)
    budget = int(vmem_cap * 0.45)
    tb = budget // _per_row_vmem_bytes(D, itemsize)
    tb = max(mult, (tb // mult) * mult)
    tb = min(tb, 8192)
    # Keep >= 2 grid steps when the batch allows it, so both v7x TensorCores
    # (dimension_semantics="parallel") share the HBM bandwidth.
    if B >= 2 * mult:
        half = ((B + 1) // 2 + mult - 1) // mult * mult
        tb = min(tb, half)
    if tb >= B:
        tb = B  # a block equal to the full dim is always legal
    return tb


def _vmem_limit_bytes(TB, D, itemsize, vmem_cap):
    need = (3 * 2 * TB * D * itemsize      # double-buffered inputs
            + 6 * TB * D * 4               # f32 temporaries
            + 2 * 8 * 128 * 4)             # double-buffered (1,8,128) output
    return int(min(max(need + (4 << 20), 32 << 20), int(vmem_cap * 0.9)))


def triplet_loss(anchor, positive, negative, margin=0.5, tile_rows=None):
    assert anchor.shape == positive.shape == negative.shape
    assert anchor.ndim == 2
    B, D = anchor.shape
    itemsize = jnp.dtype(anchor.dtype).itemsize
    mult = _row_multiple(itemsize)
    vmem_cap = _vmem_capacity_bytes()

    if tile_rows is not None:
        TB = int(min(tile_rows, B))
    else:
        TB = _choose_tile_rows(B, D, itemsize, vmem_cap)
    assert TB == B or TB % mult == 0, (
        f"row tile {TB} must equal B or be a multiple of {mult}")

    G = pl.cdiv(B, TB)                 # no jnp.pad: ragged tail masked in-kernel
    mask_tail = (B % TB) != 0
    vmem_limit = _vmem_limit_bytes(TB, D, itemsize, vmem_cap)

    cost = pl.CostEstimate(
        flops=int(9 * B * D),
        transcendentals=int(2 * B),
        bytes_accessed=int(3 * B * D * itemsize + G * 8 * 128 * 4),
    )

    partials = pl.pallas_call(
        functools.partial(
            _triplet_loss_kernel,
            margin=float(margin), batch=int(B), tile_rows=int(TB),
            mask_tail=bool(mask_tail)),
        out_shape=jax.ShapeDtypeStruct((G, 8, 128), jnp.float32),
        grid_spec=pltpu.PrefetchScalarGridSpec(
            num_scalar_prefetch=0,
            grid=(G,),
            in_specs=[
                pl.BlockSpec((TB, D), lambda i: (i, 0)),
                pl.BlockSpec((TB, D), lambda i: (i, 0)),
                pl.BlockSpec((TB, D), lambda i: (i, 0)),
            ],
            out_specs=pl.BlockSpec((1, 8, 128), lambda i: (i, 0, 0)),
        ),
        compiler_params=pltpu.CompilerParams(
            dimension_semantics=("parallel",),  # independent tiles -> both TCs
            vmem_limit_bytes=vmem_limit,
        ),
        cost_estimate=cost,
    )(anchor, positive, negative)

    # One global mean over the true batch; one element per tile is meaningful.
    return jnp.sum(partials[:, 0, 0]) / B


def _ref_loss(a, p, n, margin):
    a = a.astype(jnp.float32)
    p = p.astype(jnp.float32)
    n = n.astype(jnp.float32)
    dp = jnp.sqrt(jnp.sum((a - p + EPS) ** 2, axis=-1))
    dn = jnp.sqrt(jnp.sum((a - n + EPS) ** 2, axis=-1))
    return jnp.mean(jnp.maximum(dp - dn + margin, 0.0))


if __name__ == "__main__":
    key = jax.random.PRNGKey(0)

    # --- test 1: small f32 batch, auto tiling (2-tile grid, no ragged tail) ---
    ka, kp, kn = jax.random.split(key, 3)
    B, D = 32, 128
    a = jax.random.normal(ka, (B, D), dtype=jnp.float32)
    p = jax.random.normal(kp, (B, D), dtype=jnp.float32)
    n = jax.random.normal(kn, (B, D), dtype=jnp.float32)

    loss = triplet_loss(a, p, n, margin=0.5)
    jax.block_until_ready(loss)
    ref = _ref_loss(a, p, n, 0.5)
    assert jnp.allclose(loss, ref, rtol=1e-5, atol=1e-5), (loss, ref)

    # --- test 2: bf16 inputs, 4-tile grid with a ragged (masked) tail ---
    kb = jax.random.split(key, 4)[3]
    ka2, kp2, kn2 = jax.random.split(kb, 3)
    B2, D2 = 50, 128
    a2 = jax.random.normal(ka2, (B2, D2), dtype=jnp.float32).astype(jnp.bfloat16)
    p2 = jax.random.normal(kp2, (B2, D2), dtype=jnp.float32).astype(jnp.bfloat16)
    n2 = jax.random.normal(kn2, (B2, D2), dtype=jnp.float32).astype(jnp.bfloat16)

    loss2 = triplet_loss(a2, p2, n2, margin=0.3, tile_rows=16)  # 50 = 3*16 + 2
    jax.block_until_ready(loss2)
    ref2 = _ref_loss(a2, p2, n2, 0.3)
    assert jnp.allclose(loss2, ref2, rtol=1e-4, atol=1e-5), (loss2, ref2)

    print("KERNEL_OK")
</pallas_src>

<mosaic_0001>
module attributes {stable_mosaic.version = 11 : i64} {
  func.func @_triplet_loss_kernel(%arg0: i32, %arg1: memref<16x128xf32, #tpu.memory_space<vmem>>, %arg2: memref<16x128xf32, #tpu.memory_space<vmem>>, %arg3: memref<16x128xf32, #tpu.memory_space<vmem>>, %arg4: memref<1x8x128xf32, #tpu.memory_space<vmem>>) attributes {dimension_semantics = [#tpu.dimension_semantics<parallel>], iteration_bounds = array<i64: 2>, scalar_prefetch = 0 : i64, scratch_operands = 0 : i64, tpu.core_type = #tpu.core_type<tc>, window_params = [{transform_indices = @transform_0, window_bounds = array<i64: 16, 128>}, {transform_indices = @transform_1, window_bounds = array<i64: 16, 128>}, {transform_indices = @transform_2, window_bounds = array<i64: 16, 128>}, {transform_indices = @transform_3, window_bounds = array<i64: 1, 8, 128>}]} {
    %c0 = arith.constant 0 : index
    %c0_0 = arith.constant 0 : index
    %0 = vector.load %arg1[%c0, %c0_0] : memref<16x128xf32, #tpu.memory_space<vmem>>, vector<16x128xf32>
    %c0_1 = arith.constant 0 : index
    %c0_2 = arith.constant 0 : index
    %1 = vector.load %arg2[%c0_1, %c0_2] : memref<16x128xf32, #tpu.memory_space<vmem>>, vector<16x128xf32>
    %c0_3 = arith.constant 0 : index
    %c0_4 = arith.constant 0 : index
    %2 = vector.load %arg3[%c0_3, %c0_4] : memref<16x128xf32, #tpu.memory_space<vmem>>, vector<16x128xf32>
    %3 = arith.subf %0, %1 : vector<16x128xf32>
    %cst = arith.constant 9.99999997E-7 : f32
    %4 = vector.broadcast %cst : f32 to vector<16x128xf32>
    %5 = arith.addf %3, %4 : vector<16x128xf32>
    %6 = arith.mulf %5, %5 : vector<16x128xf32>
    %cst_5 = arith.constant dense<0.000000e+00> : vector<16xf32>
    %7 = vector.multi_reduction <add>, %6, %cst_5 [1] : vector<16x128xf32> to vector<16xf32>
    %8 = vector.shape_cast %7 : vector<16xf32> to vector<16x1xf32>
    %9 = math.sqrt %8 : vector<16x1xf32>
    %10 = arith.subf %0, %2 : vector<16x128xf32>
    %cst_6 = arith.constant 9.99999997E-7 : f32
    %11 = vector.broadcast %cst_6 : f32 to vector<16x128xf32>
    %12 = arith.addf %10, %11 : vector<16x128xf32>
    %13 = arith.mulf %12, %12 : vector<16x128xf32>
    %cst_7 = arith.constant dense<0.000000e+00> : vector<16xf32>
    %14 = vector.multi_reduction <add>, %13, %cst_7 [1] : vector<16x128xf32> to vector<16xf32>
    %15 = vector.shape_cast %14 : vector<16xf32> to vector<16x1xf32>
    %16 = math.sqrt %15 : vector<16x1xf32>
    %17 = arith.subf %9, %16 : vector<16x1xf32>
    %cst_8 = arith.constant 5.000000e-01 : f32
    %18 = vector.broadcast %cst_8 : f32 to vector<16x1xf32>
    %19 = arith.addf %17, %18 : vector<16x1xf32>
    %cst_9 = arith.constant 0.000000e+00 : f32
    %20 = vector.broadcast %cst_9 : f32 to vector<16x1xf32>
    %21 = arith.maximumf %19, %20 : vector<16x1xf32>
    %cst_10 = arith.constant dense<0.000000e+00> : vector<1xf32>
    %22 = vector.multi_reduction <add>, %21, %cst_10 [0] : vector<16x1xf32> to vector<1xf32>
    %23 = vector.shape_cast %22 : vector<1xf32> to vector<1x1xf32>
    %24 = vector.shape_cast %23 : vector<1x1xf32> to vector<1x1xf32>
    %25 = vector.broadcast %24 : vector<1x1xf32> to vector<8x128xf32>
    %c0_11 = arith.constant 0 : index
    %c0_12 = arith.constant 0 : index
    %c0_13 = arith.constant 0 : index
    %26 = vector.load %arg4[%c0_11, %c0_12, %c0_13] : memref<1x8x128xf32, #tpu.memory_space<vmem>>, vector<1x8x128xf32>
    %27 = vector.shape_cast %26 : vector<1x8x128xf32> to vector<8x128xf32>
    %28 = vector.shape_cast %25 : vector<8x128xf32> to vector<1x8x128xf32>
    tpu.vector_store %arg4[%c0_11, %c0_12, %c0_13], %28 {strides = array<i32>} : memref<1x8x128xf32, #tpu.memory_space<vmem>>, vector<1x8x128xf32>,
    return
  }
  func.func @transform_0(%arg0: i32) -> (i32, i32) {
    %c0_i32 = arith.constant 0 : i32
    %c0_i32_0 = arith.constant 0 : i32
    return %arg0, %c0_i32 : i32, i32
  }
  func.func @transform_1(%arg0: i32) -> (i32, i32) {
    %c0_i32 = arith.constant 0 : i32
    %c0_i32_0 = arith.constant 0 : i32
    return %arg0, %c0_i32 : i32, i32
  }
  func.func @transform_2(%arg0: i32) -> (i32, i32) {
    %c0_i32 = arith.constant 0 : i32
    %c0_i32_0 = arith.constant 0 : i32
    return %arg0, %c0_i32 : i32, i32
  }
  func.func @transform_3(%arg0: i32) -> (i32, i32, i32) {
    %c0_i32 = arith.constant 0 : i32
    %c0_i32_0 = arith.constant 0 : i32
    %c0_i32_1 = arith.constant 0 : i32
    return %arg0, %c0_i32, %c0_i32_0 : i32, i32, i32
  }
}

</mosaic_0001>

<llo_original>
// kernel: tpu_custom_call.1
$region0: #{tpu_custom_call.1}
  #allocation0 [shape = 'u32[]', space=smem, size = 0x4, offset = 0x4, fixed_abs, tag = 'smem constant byte address 0x4 - core index']
  #allocation1 [shape = 'u32[144,128]{1,0:T(1,128)}', space=vmem, size = 0x12000, scoped, tag = 'internal scratch']
  %s0 = inlined_call_operand.hbm [shape: f32[32,128], index: 0, kind: input, shape index: {}]
  %s1 = inlined_call_operand.hbm [shape: f32[32,128], index: 1, kind: input, shape index: {}]
  %s2 = inlined_call_operand.hbm [shape: f32[32,128], index: 2, kind: input, shape index: {}]
  %s3 = inlined_call_operand.hbm [shape: f32[2,8,128], index: 3, kind: output, shape index: {}]
  %s4 = sld [smem:[#allocation0]]
  $region57: #{tpu_custom_call.1} parent=0
    _
  %s6 = ssub.s32 1, %s4
  %s7 = scalar_select 0, %s6, %s4
  $region1: #{tpu_custom_call.1} parent=0
    #allocation2 [shape = 'u8[16384]{0}', space=vmem, size = 0x4000, scoped, tag = 'input window, operand 0']
    #allocation3 [shape = 's32[2]{0}', space=sflag, size = 0x8, scoped, tag = 'scoped memory for tpu_custom_call.1']
    #allocation4 [shape = 's32[2]{0}', space=sflag, size = 0x8, scoped, tag = 'scoped memory for tpu_custom_call.1']
    #allocation5 [shape = 'u8[16384]{0}', space=vmem, size = 0x4000, scoped, tag = 'input window, operand 1']
    #allocation6 [shape = 's32[2]{0}', space=sflag, size = 0x8, scoped, tag = 'scoped memory for tpu_custom_call.1']
    #allocation7 [shape = 'u8[16384]{0}', space=vmem, size = 0x4000, scoped, tag = 'input window, operand 2']
    #allocation8 [shape = 'u8[8192]{0}', space=vmem, size = 0x2000, scoped, tag = 'output window, operand 0']
    %8 = vsyncpa [#allocation3], 0
    %s9 = scalar_lea.sflag [#allocation3], 1
    %10 = vsyncpa %s9, 0
    %11 = vsyncpa [#allocation6], 0
    %s12 = scalar_lea.sflag [#allocation6], 1
    %13 = vsyncpa %s12, 0
    %14 = vsyncpa [#allocation4], 0
    %s15 = scalar_lea.sflag [#allocation4], 1
    %16 = vsyncpa %s15, 0
    loop: start=0, step=1, limit=4
    $region2: #{tpu_custom_call.1} parent=1 // loop_pre_header
      _
    $region3: #{tpu_custom_call.1} parent=1 // loop_header
      %s18 = sphi 0, %s22
      %p19 = scmp.ge.s32.totalorder %s18, 4
      %s28 = sphi 0, %s30
      %s31 = sphi 0, %s28
      %s32 = sphi 0, %s31
      %s48 = sphi 0, %s32
      %s54 = sphi 0, %s56
      %s57 = sphi 0, %s54
      %s58 = sphi 0, %s57
      %s74 = sphi 0, %s58
      %s80 = sphi 0, %s82
      %s83 = sphi 0, %s80
      %s84 = sphi 0, %s83
      %s100 = sphi 0, %s84
      %s106 = sphi 0, %s108
      %s109 = sphi 0, %s106
      %s110 = sphi 0, %s109
      %s126 = sphi 0, %s110
    $region4: #{tpu_custom_call.1} parent=1 // loop_header_branch
      %21 = sbr.rel (%p19) target = $region8
    $region5: #{tpu_custom_call.1} parent=1 // loop_body
      %s23 = ssub.s32 %s18, 1
      %s24 = ssub.s32 %s18, 2
      %s25 = sadd.s32 %s18, 1
      %s26 = ssub.s32 %s18, %s25
      %p27 = scmp.eq.s32.totalorder %s26, 0
      %s29 = sadd.s32 %s28, 1
      %s30 = scalar_select %p27, %s28, %s29
      %p33 = pneg %p27
      %p34 = scmp.eq.s32.totalorder %s18, 1
      %p35 = por %p33, %p34
      %p36 = scmp.ne.s32.totalorder %s28, %s31
      %p37 = scmp.eq.s32.totalorder %s18, 0
      %p38 = por %p36, %p37
      %p39 = scmp.ne.s32.totalorder %s28, %s31
      %p40 = scmp.eq.s32.totalorder %s23, 1
      %p41 = por %p39, %p40
      %p42 = scmp.ne.s32.totalorder %s31, %s32
      %p43 = scmp.eq.s32.totalorder %s23, 0
      %p44 = por %p42, %p43
      %p45 = scmp.ne.s32.totalorder %s31, %s32
      %p46 = scmp.eq.s32.totalorder %s24, 1
      %p47 = por %p45, %p46
      %p49 = scmp.ne.s32.totalorder %s32, %s48
      %p50 = scmp.eq.s32.totalorder %s24, 0
      %p51 = por %p49, %p50
      %s52 = ssub.s32 %s18, %s25
      %p53 = scmp.eq.s32.totalorder %s52, 0
      %s55 = sadd.s32 %s54, 1
      %s56 = scalar_select %p53, %s54, %s55
      %p59 = pneg %p53
      %p60 = scmp.eq.s32.totalorder %s18, 1
      %p61 = por %p59, %p60
      %p62 = scmp.ne.s32.totalorder %s54, %s57
      %p63 = scmp.eq.s32.totalorder %s18, 0
      %p64 = por %p62, %p63
      %p65 = scmp.ne.s32.totalorder %s54, %s57
      %p66 = scmp.eq.s32.totalorder %s23, 1
      %p67 = por %p65, %p66
      %p68 = scmp.ne.s32.totalorder %s57, %s58
      %p69 = scmp.eq.s32.totalorder %s23, 0
      %p70 = por %p68, %p69
      %p71 = scmp.ne.s32.totalorder %s57, %s58
      %p72 = scmp.eq.s32.totalorder %s24, 1
      %p73 = por %p71, %p72
      %p75 = scmp.ne.s32.totalorder %s58, %s74
      %p76 = scmp.eq.s32.totalorder %s24, 0
      %p77 = por %p75, %p76
      %s78 = ssub.s32 %s18, %s25
      %p79 = scmp.eq.s32.totalorder %s78, 0
      %s81 = sadd.s32 %s80, 1
      %s82 = scalar_select %p79, %s80, %s81
      %p85 = pneg %p79
      %p86 = scmp.eq.s32.totalorder %s18, 1
      %p87 = por %p85, %p86
      %p88 = scmp.ne.s32.totalorder %s80, %s83
      %p89 = scmp.eq.s32.totalorder %s18, 0
      %p90 = por %p88, %p89
      %p91 = scmp.ne.s32.totalorder %s80, %s83
      %p92 = scmp.eq.s32.totalorder %s23, 1
      %p93 = por %p91, %p92
      %p94 = scmp.ne.s32.totalorder %s83, %s84
      %p95 = scmp.eq.s32.totalorder %s23, 0
      %p96 = por %p94, %p95
      %p97 = scmp.ne.s32.totalorder %s83, %s84
      %p98 = scmp.eq.s32.totalorder %s24, 1
      %p99 = por %p97, %p98
      %p101 = scmp.ne.s32.totalorder %s84, %s100
      %p102 = scmp.eq.s32.totalorder %s24, 0
      %p103 = por %p101, %p102
      %s104 = ssub.s32 %s18, %s25
      %p105 = scmp.eq.s32.totalorder %s104, 0
      %s107 = sadd.s32 %s106, 1
      %s108 = scalar_select %p105, %s106, %s107
      %p111 = pneg %p105
      %p112 = scmp.eq.s32.totalorder %s18, 1
      %p113 = por %p111, %p112
      %p114 = scmp.ne.s32.totalorder %s106, %s109
      %p115 = scmp.eq.s32.totalorder %s18, 0
      %p116 = por %p114, %p115
      %p117 = scmp.ne.s32.totalorder %s106, %s109
      %p118 = scmp.eq.s32.totalorder %s23, 1
      %p119 = por %p117, %p118
      %p120 = scmp.ne.s32.totalorder %s109, %s110
      %p121 = scmp.eq.s32.totalorder %s23, 0
      %p122 = por %p120, %p121
      %p123 = scmp.ne.s32.totalorder %s109, %s110
      %p124 = scmp.eq.s32.totalorder %s24, 1
      %p125 = por %p123, %p124
      %p127 = scmp.ne.s32.totalorder %s110, %s126
      %p128 = scmp.eq.s32.totalorder %s24, 0
      %p129 = por %p127, %p128
      %p130 = scmp.le.s32.totalorder 1, %s18
      %p131 = scmp.lt.s32.totalorder %s18, 3
      %p132 = pnand %p130, %p131
      %p133 = pneg %p132
      // Predicated region
      $region9: #{tpu_custom_call.1} parent=5 // pred_check
        _
      $region10: #{tpu_custom_call.1} parent=5 // pred_check_branch
        %135 = sbr.rel (%p132) target = $region12
      $region11: #{tpu_custom_call.1} parent=5 // pred_region
        %s136 = ssub.s32 %s18, 1
      $region12: #{tpu_custom_call.1} parent=5 // pred_fallthru
        _
      %p137 = scmp.lt.s32.totalorder %s18, 2
      // Predicated region
      $region13: #{tpu_custom_call.1} parent=5 // pred_check
        %p138 = pneg %p137
      $region14: #{tpu_custom_call.1} parent=5 // pred_check_branch
        %140 = sbr.rel (%p138) target = $region16
      $region15: #{tpu_custom_call.1} parent=5 // pred_region
        // Predicated region
        $region17: #{tpu_custom_call.1} parent=15 // pred_check
          %p141 = pneg %p38
        $region18: #{tpu_custom_call.1} parent=15 // pred_check_branch
          %143 = sbr.rel (%p141) target = $region20
        $region19: #{tpu_custom_call.1} parent=15 // pred_region
          %s144 = sand.u32 %s28, 1
          %s145 = scalar_lea.sflag [#allocation3], %s144
          %s146 = sand.u32 %s28, 1
          %s147 = smul.addr %s146, 16
          %s148 = scalar_lea.vmem [#allocation2], %s147
          %s149 = smul.u32 2, %s18
          %s151 = ssub.s32 256, 256
          %152 = vsyncadd %s145, %s151
          %s153 = smul.addr %s149, 128
          %s154 = scalar_lea.hbm %s0, %s153
          %s155 = sshll.u32 %s148, 4
          %s156 = int_to_ptr.vmem [resolvable:$true] %s155
          %161 = dma.hbm_to_vmem [thread:$0]  %s154, 256, %s156, %s145, 128, 128, 8
        $region20: #{tpu_custom_call.1} parent=15 // pred_fallthru
          _
        // Predicated region
        $region21: #{tpu_custom_call.1} parent=15 // pred_check
          %p162 = pneg %p64
        $region22: #{tpu_custom_call.1} parent=15 // pred_check_branch
          %164 = sbr.rel (%p162) target = $region24
        $region23: #{tpu_custom_call.1} parent=15 // pred_region
          %s165 = sand.u32 %s18, 1
          %s166 = scalar_lea.sflag [#allocation6], %s165
          %s167 = sand.u32 %s54, 1
          %s168 = smul.addr %s167, 16
          %s169 = scalar_lea.vmem [#allocation5], %s168
          %s170 = smul.u32 2, %s18
          %s172 = ssub.s32 256, 256
          %173 = vsyncadd %s166, %s172
          %s174 = smul.addr %s170, 128
          %s175 = scalar_lea.hbm %s1, %s174
          %s176 = sshll.u32 %s169, 4
          %s177 = int_to_ptr.vmem [resolvable:$true] %s176
          %182 = dma.hbm_to_vmem [thread:$0]  %s175, 256, %s177, %s166, 128, 128, 8
        $region24: #{tpu_custom_call.1} parent=15 // pred_fallthru
          _
        // Predicated region
        $region25: #{tpu_custom_call.1} parent=15 // pred_check
          %p183 = pneg %p90
        $region26: #{tpu_custom_call.1} parent=15 // pred_check_branch
          %185 = sbr.rel (%p183) target = $region28
        $region27: #{tpu_custom_call.1} parent=15 // pred_region
          %s186 = sand.u32 %s18, 1
          %s187 = scalar_lea.sflag [#allocation6], %s186
          %s188 = sand.u32 %s80, 1
          %s189 = smul.addr %s188, 16
          %s190 = scalar_lea.vmem [#allocation7], %s189
          %s191 = smul.u32 2, %s18
          %s193 = ssub.s32 256, 256
          %194 = vsyncadd %s187, %s193
          %s195 = smul.addr %s191, 128
          %s196 = scalar_lea.hbm %s2, %s195
          %s197 = sshll.u32 %s190, 4
          %s198 = int_to_ptr.vmem [resolvable:$true] %s197
          %203 = dma.hbm_to_vmem [thread:$0]  %s196, 256, %s198, %s187, 128, 128, 8
        $region28: #{tpu_custom_call.1} parent=15 // pred_fallthru
          _
      $region16: #{tpu_custom_call.1} parent=5 // pred_fallthru
        _
      %p204 = scmp.le.s32.totalorder 1, %s18
      %p205 = scmp.lt.s32.totalorder %s18, 3
      %p206 = pnand %p204, %p205
      %p207 = pneg %p206
      // Predicated region
      $region29: #{tpu_custom_call.1} parent=5 // pred_check
        _
      $region30: #{tpu_custom_call.1} parent=5 // pred_check_branch
        %209 = sbr.rel (%p206) target = $region32
      $region31: #{tpu_custom_call.1} parent=5 // pred_region
        %s210 = ssub.s32 %s18, 1
        %s211 = sand.u32 %s31, 1
        %s212 = scalar_lea.sflag [#allocation3], %s211
        %s213 = sand.u32 %s31, 1
        %s214 = smul.addr %s213, 16
        %s215 = scalar_lea.vmem [#allocation2], %s214
        // Predicated region
        $region33: #{tpu_custom_call.1} parent=31 // pred_check
          %p216 = pneg %p44
        $region34: #{tpu_custom_call.1} parent=31 // pred_check_branch
          %218 = sbr.rel (%p216) target = $region36
        $region35: #{tpu_custom_call.1} parent=31 // pred_region
          %219 = dma.done %s212, 256
        $region36: #{tpu_custom_call.1} parent=31 // pred_fallthru
          _
        %s220 = sand.u32 %s23, 1
        %s221 = scalar_lea.sflag [#allocation6], %s220
        %s222 = sand.u32 %s57, 1
        %s223 = smul.addr %s222, 16
        %s224 = scalar_lea.vmem [#allocation5], %s223
        // Predicated region
        $region37: #{tpu_custom_call.1} parent=31 // pred_check
          %p225 = pneg %p70
        $region38: #{tpu_custom_call.1} parent=31 // pred_check_branch
          %227 = sbr.rel (%p225) target = $region40
        $region39: #{tpu_custom_call.1} parent=31 // pred_region
          %228 = dma.done %s221, 256
        $region40: #{tpu_custom_call.1} parent=31 // pred_fallthru
          _
        %s229 = sand.u32 %s23, 1
        %s230 = scalar_lea.sflag [#allocation6], %s229
        %s231 = sand.u32 %s83, 1
        %s232 = smul.addr %s231, 16
        %s233 = scalar_lea.vmem [#allocation7], %s232
        // Predicated region
        $region41: #{tpu_custom_call.1} parent=31 // pred_check
          %p234 = pneg %p96
        $region42: #{tpu_custom_call.1} parent=31 // pred_check_branch
          %236 = sbr.rel (%p234) target = $region44
        $region43: #{tpu_custom_call.1} parent=31 // pred_region
          %237 = dma.done %s230, 256
        $region44: #{tpu_custom_call.1} parent=31 // pred_fallthru
          _
        %s238 = sand.u32 %s31, 1
        %s239 = scalar_lea.sflag [#allocation3], %s238
        %s240 = sand.u32 %s31, 1
        %s241 = smul.addr %s240, 16
        %s242 = scalar_lea.vmem [#allocation2], %s241
        %p243 = pneg %p44
        %p244 = pneg %p41
        %s245 = sand.u32 %s23, 1
        %s246 = scalar_lea.sflag [#allocation6], %s245
        %s247 = sand.u32 %s57, 1
        %s248 = smul.addr %s247, 16
        %s249 = scalar_lea.vmem [#allocation5], %s248
        %p250 = pneg %p70
        %p251 = pneg %p67
        %s252 = sand.u32 %s23, 1
        %s253 = scalar_lea.sflag [#allocation6], %s252
        %s254 = sand.u32 %s83, 1
        %s255 = smul.addr %s254, 16
        %s256 = scalar_lea.vmem [#allocation7], %s255
        %p257 = pneg %p96
        %p258 = pneg %p93
        %p259 = pneg %p122
        %p260 = pneg %p119
        %s261 = sand.u32 %s109, 1
        %s262 = scalar_lea.sflag [#allocation4], %s261
        %s263 = sand.u32 %s109, 1
        %s264 = smul.addr %s263, 8
        %s265 = scalar_lea.vmem [#allocation8], %s264
        %s266 = smul.u32 2, %s23
        %s267 = smul.u32 2, %s23
        %s268 = smul.u32 2, %s23
        %v269 = vld [vmem:[%s215] sm:$0xff]
        %v270 = vld [vmem:[%s215 + $0x8] sm:$0xff]
        %v271 = vld [vmem:[%s224] sm:$0xff]
        %v272 = vld [vmem:[%s224 + $0x8] sm:$0xff]
        %v273 = vld [vmem:[%s233] sm:$0xff]
        %v274 = vld [vmem:[%s233 + $0x8] sm:$0xff]
        %v275 = vsub.f32 %v269, %v271
        %v276 = vsub.f32 %v270, %v272
        %v277 = vadd.f32 %v275, 1e-06
        %v278 = vadd.f32 %v276, 1e-06
        %v279 = vmul.f32 %v277, %v277
        %v280 = vmul.f32 %v278, %v278
        %281 = vadd.xlane.f32.xlu0 %v279
        %v282 = vpop.xlane.xlu0 %281
        %283 = vadd.xlane.f32.xlu0 %v280
        %v284 = vpop.xlane.xlu0 %283
        %v285 = vrsqrt.pop %v282
        %v286 = vmul.f32 %v282, %v285
        %vm287 = vcmp.eq.f32.partialorder %v282, inf
        %v288 = vsel %vm287, %v282, %v286
        %vm289 = vcmp.eq.f32.partialorder %v282, 0.0
        %v290 = vand.u32 %v282, 2147483648
        %v291 = vsel %vm289, %v290, %v288
        %v292 = vrsqrt.pop %v284
        %v293 = vmul.f32 %v284, %v292
        %vm294 = vcmp.eq.f32.partialorder %v284, inf
        %v295 = vsel %vm294, %v284, %v293
        %vm296 = vcmp.eq.f32.partialorder %v284, 0.0
        %v297 = vand.u32 %v284, 2147483648
        %v298 = vsel %vm296, %v297, %v295
        %v299 = vsub.f32 %v269, %v273
        %v300 = vsub.f32 %v270, %v274
        %v301 = vadd.f32 %v299, 1e-06
        %v302 = vadd.f32 %v300, 1e-06
        %v303 = vmul.f32 %v301, %v301
        %v304 = vmul.f32 %v302, %v302
        %305 = vadd.xlane.f32.xlu0 %v303
        %v306 = vpop.xlane.xlu0 %305
        %307 = vadd.xlane.f32.xlu0 %v304
        %v308 = vpop.xlane.xlu0 %307
        %v309 = vrsqrt.pop %v306
        %v310 = vmul.f32 %v306, %v309
        %vm311 = vcmp.eq.f32.partialorder %v306, inf
        %v312 = vsel %vm311, %v306, %v310
        %vm313 = vcmp.eq.f32.partialorder %v306, 0.0
        %v314 = vand.u32 %v306, 2147483648
        %v315 = vsel %vm313, %v314, %v312
        %v316 = vrsqrt.pop %v308
        %v317 = vmul.f32 %v308, %v316
        %vm318 = vcmp.eq.f32.partialorder %v308, inf
        %v319 = vsel %vm318, %v308, %v317
        %vm320 = vcmp.eq.f32.partialorder %v308, 0.0
        %v321 = vand.u32 %v308, 2147483648
        %v322 = vsel %vm320, %v321, %v319
        %v323 = vsub.f32 %v291, %v315
        %v324 = vsub.f32 %v298, %v322
        %v325 = vadd.f32 %v323, 0.5
        %v326 = vadd.f32 %v324, 0.5
        %v327 = vmax.f32 %v325, 0.0
        %v328 = vmax.f32 %v326, 0.0
        %v329 = vadd.f32 %v327, %v328
        %v330 = vrot.slane %v329, 4
        %v331 = vadd.f32 %v329, %v330
        %v332 = vrot.slane %v331, 2
        %v333 = vadd.f32 %v331, %v332
        %v334 = vrot.slane %v333, 1
        %v335 = vadd.f32 %v333, %v334
        %336 = vst [vmem:[%s265] sm:$0xff] %v335
        %s337 = sand.u32 %s109, 1
        %s338 = scalar_lea.sflag [#allocation4], %s337
        %s339 = sand.u32 %s109, 1
        %s340 = smul.addr %s339, 8
        %s341 = scalar_lea.vmem [#allocation8], %s340
        // Predicated region
        $region45: #{tpu_custom_call.1} parent=31 // pred_check
          %p342 = pneg %p119
        $region46: #{tpu_custom_call.1} parent=31 // pred_check_branch
          %344 = sbr.rel (%p342) target = $region48
        $region47: #{tpu_custom_call.1} parent=31 // pred_region
          %s346 = ssub.s32 128, 128
          %347 = vsyncadd %s338, %s346
          %s348 = smul.addr %s23, 128
          %s349 = scalar_lea.hbm %s3, %s348
          %s351 = sshll.u32 %s341, 4
          %s352 = int_to_ptr.vmem [resolvable:$true] %s351
          %354 = dma.vmem_to_hbm [thread:$0]  %s352, 128, %s349, %s338
        $region48: #{tpu_custom_call.1} parent=31 // pred_fallthru
          _
      $region32: #{tpu_custom_call.1} parent=5 // pred_fallthru
        _
      %p355 = scmp.le.s32.totalorder 2, %s18
      // Predicated region
      $region49: #{tpu_custom_call.1} parent=5 // pred_check
        %p356 = pneg %p355
      $region50: #{tpu_custom_call.1} parent=5 // pred_check_branch
        %358 = sbr.rel (%p356) target = $region52
      $region51: #{tpu_custom_call.1} parent=5 // pred_region
        %s359 = ssub.s32 %s18, 2
        // Predicated region
        $region53: #{tpu_custom_call.1} parent=51 // pred_check
          %p360 = pneg %p125
        $region54: #{tpu_custom_call.1} parent=51 // pred_check_branch
          %362 = sbr.rel (%p360) target = $region56
        $region55: #{tpu_custom_call.1} parent=51 // pred_region
          %s363 = sand.u32 %s110, 1
          %s364 = scalar_lea.sflag [#allocation4], %s363
          %s365 = sand.u32 %s110, 1
          %s366 = smul.addr %s365, 8
          %s367 = scalar_lea.vmem [#allocation8], %s366
          %368 = dma.done %s364, 128
        $region56: #{tpu_custom_call.1} parent=51 // pred_fallthru
          _
      $region52: #{tpu_custom_call.1} parent=5 // pred_fallthru
        _
    $region6: #{tpu_custom_call.1} parent=1 // loop_footer
      %s22 = sadd.s32 1, %s18
    $region7: #{tpu_custom_call.1} parent=1 // loop_footer_branch
      %17 = sbr.rel target = $region3
    $region8: #{tpu_custom_call.1} parent=1 // loop_exit
      _
    %369 = vsyncpa [#allocation3], 1
    %s370 = scalar_lea.sflag [#allocation3], 1
    %371 = vsyncpa %s370, 1
    %372 = vsyncpa [#allocation6], 1
    %s373 = scalar_lea.sflag [#allocation6], 1
    %374 = vsyncpa %s373, 1
    %375 = vsyncpa [#allocation4], 1
    %s376 = scalar_lea.sflag [#allocation4], 1
    %377 = vsyncpa %s376, 1

</llo_original>
